<compile_context>
chip_gen: v5e
topology: v5e:2x2
jax: 0.10.0
libtpu: 0.0.40
codegen_flags: <defaults>
</compile_context>

<pallas_src>
import jax
import jax.numpy as jnp
from jax.experimental import pallas as pl
from jax.experimental.pallas import tpu as pltpu

f32 = jnp.float32


def _round_up(x, m):
    return (x + m - 1) // m * m


def _pick_tile(size, candidates=(512, 256, 128)):
    for c in candidates:
        if size % c == 0:
            return c
    return size


# ----------------------------------------------------------------------------
# K1: hw = relu(x @ Wenc + benc) @ Wgcn        (per node-row block)
# ----------------------------------------------------------------------------
def _node_proj_kernel(x_ref, wenc_ref, benc_ref, wgcn_ref, hw_ref):
    h1 = jnp.dot(x_ref[...], wenc_ref[...], preferred_element_type=f32)
    h1 = jnp.maximum(h1 + benc_ref[...], 0.0)
    hw_ref[...] = jnp.dot(h1, wgcn_ref[...], preferred_element_type=f32)


# ----------------------------------------------------------------------------
# K2: h2 = relu(A_norm @ hw + bgcn);  ps/pd = per-node edge-head projections
# ----------------------------------------------------------------------------
def _gcn_agg_kernel(a_ref, hw_ref, bgcn_ref, wes_ref, wed_ref,
                    ps_ref, pd_ref, acc_ref):
    k = pl.program_id(1)

    @pl.when(k == 0)
    def _():
        acc_ref[...] = jnp.zeros_like(acc_ref)

    acc_ref[...] += jnp.dot(a_ref[...], hw_ref[...],
                            preferred_element_type=f32)

    @pl.when(k == pl.num_programs(1) - 1)
    def _():
        h2 = jnp.maximum(acc_ref[...] + bgcn_ref[...], 0.0)            # (TN, H)
        # dropout: identity in eval mode (no-op)
        # (., H) x (H, 1) products on the VPU (mul + lane reduce), not the MXU.
        ps_ref[...] = jnp.sum(h2 * wes_ref[...], axis=-1, keepdims=True)
        pd_ref[...] = jnp.sum(h2 * wed_ref[...], axis=-1, keepdims=True)


# ----------------------------------------------------------------------------
# K3: scores = sigmoid(ps[src] + pd[dst] + b_edge)
#     (in-kernel gather via iota==index masks; edges on lanes -> lane-dense out)
# ----------------------------------------------------------------------------
def _edge_head_kernel(src_ref, dst_ref, ps_ref, pd_ref, be_ref,
                      out_ref, acc_ref):
    n = pl.program_id(1)

    @pl.when(n == 0)
    def _():
        acc_ref[...] = jnp.zeros_like(acc_ref)

    node_tile = ps_ref.shape[0]
    edge_tile = out_ref.shape[-1]
    node_ids = (jax.lax.broadcasted_iota(jnp.int32, (node_tile, edge_tile), 0)
                + n * node_tile)                                        # (TN, TE)
    src = src_ref[...]                                                  # (1, TE) i32
    dst = dst_ref[...]
    ps = ps_ref[...]                                                    # (TN, 1) f32
    pd = pd_ref[...]
    gath_s = jnp.sum(jnp.where(node_ids == src, ps, 0.0),
                     axis=0, keepdims=True)                             # (1, TE)
    gath_d = jnp.sum(jnp.where(node_ids == dst, pd, 0.0),
                     axis=0, keepdims=True)
    acc_ref[...] += gath_s + gath_d

    @pl.when(n == pl.num_programs(1) - 1)
    def _():
        out_ref[...] = jax.nn.sigmoid(acc_ref[...] + be_ref[0, 0])


# ----------------------------------------------------------------------------
# Graph preprocessing (depends only on edge_index -> cache across timesteps)
# ----------------------------------------------------------------------------
def precompute_graph(edge_index, num_nodes):
    N = int(num_nodes)
    E = int(edge_index.shape[1])
    n_pad = _round_up(max(N, 8), 128)
    e_pad = _round_up(max(E, 1), 128)

    # PyG gcn_norm (add_self_loops=True): D^-1/2 (A + I) D^-1/2, dst-major rows.
    loops = jnp.arange(N, dtype=edge_index.dtype)
    ei = jnp.concatenate([edge_index, jnp.stack([loops, loops], 0)], axis=1)
    row, col = ei[0], ei[1]
    deg = jnp.zeros((N,), f32).at[col].add(1.0)
    dinv = jnp.where(deg > 0, 1.0 / jnp.sqrt(deg), 0.0)
    norm = dinv[row] * dinv[col]
    # out[dst] += norm * x[src]  <=>  A_norm[dst, src] += norm
    a_norm = jnp.zeros((n_pad, n_pad), f32).at[col, row].add(norm)

    src = jnp.pad(edge_index[0].astype(jnp.int32), (0, e_pad - E)).reshape(1, e_pad)
    dst = jnp.pad(edge_index[1].astype(jnp.int32), (0, e_pad - E)).reshape(1, e_pad)
    return a_norm, src, dst, n_pad, e_pad


# ----------------------------------------------------------------------------
# Forward (matches DiffGCN.forward, eval mode). x_t_dt / dt are unused.
# ----------------------------------------------------------------------------
def diffgcn_forward(x_t, x_t_dt, edge_index, params, dt=None, graph=None):
    del x_t_dt, dt
    N, F = x_t.shape
    E = edge_index.shape[1]
    (w_enc, b_enc, w_gcn, b_gcn, w_edge, b_edge) = params
    H = w_enc.shape[1]

    if graph is None:
        graph = precompute_graph(edge_index, N)
    a_norm, src_ids, dst_ids, n_pad, e_pad = graph

    x_pad = jnp.pad(x_t.astype(f32), ((0, n_pad - N), (0, 0)))
    w_enc = w_enc.astype(f32)
    b_enc = b_enc.astype(f32).reshape(1, H)
    w_gcn = w_gcn.astype(f32)
    b_gcn = b_gcn.astype(f32).reshape(1, H)
    w_e_src = w_edge[:H].astype(f32).reshape(1, H)
    w_e_dst = w_edge[H:].astype(f32).reshape(1, H)
    b_e = jnp.asarray(b_edge, f32).reshape(1, 1)

    tn = _pick_tile(n_pad)                  # node tile (rows & reduction cols)
    te = _pick_tile(e_pad, (256, 128))      # edge tile (output lanes)

    # --- K1: node encoder + GCN linear ------------------------------------
    hw = pl.pallas_call(
        _node_proj_kernel,
        out_shape=jax.ShapeDtypeStruct((n_pad, H), f32),
        grid=(n_pad // tn,),
        in_specs=[
            pl.BlockSpec((tn, F), lambda i: (i, 0)),
            pl.BlockSpec((F, H), lambda i: (0, 0)),
            pl.BlockSpec((1, H), lambda i: (0, 0)),
            pl.BlockSpec((H, H), lambda i: (0, 0)),
        ],
        out_specs=pl.BlockSpec((tn, H), lambda i: (i, 0)),
        compiler_params=pltpu.CompilerParams(
            dimension_semantics=("parallel",)),
    )(x_pad, w_enc, b_enc, w_gcn)

    # --- K2: tiled aggregation + per-node projections ----------------------
    ps, pd = pl.pallas_call(
        _gcn_agg_kernel,
        out_shape=(jax.ShapeDtypeStruct((n_pad, 1), f32),
                   jax.ShapeDtypeStruct((n_pad, 1), f32)),
        grid=(n_pad // tn, n_pad // tn),
        in_specs=[
            pl.BlockSpec((tn, tn), lambda i, k: (i, k)),
            pl.BlockSpec((tn, H), lambda i, k: (k, 0)),
            pl.BlockSpec((1, H), lambda i, k: (0, 0)),
            pl.BlockSpec((1, H), lambda i, k: (0, 0)),
            pl.BlockSpec((1, H), lambda i, k: (0, 0)),
        ],
        out_specs=(pl.BlockSpec((tn, 1), lambda i, k: (i, 0)),
                   pl.BlockSpec((tn, 1), lambda i, k: (i, 0))),
        scratch_shapes=[pltpu.VMEM((tn, H), f32)],
        compiler_params=pltpu.CompilerParams(
            dimension_semantics=("parallel", "arbitrary")),
        cost_estimate=pl.CostEstimate(
            flops=2 * n_pad * n_pad * H,
            transcendentals=0,
            bytes_accessed=4 * (n_pad * n_pad + n_pad * H + 2 * n_pad)),
    )(a_norm, hw, b_gcn, w_e_src, w_e_dst)

    # --- K3: edge head (gather + sigmoid), lane-dense output ----------------
    scores = pl.pallas_call(
        _edge_head_kernel,
        out_shape=jax.ShapeDtypeStruct((1, e_pad), f32),
        grid=(e_pad // te, n_pad // tn),
        in_specs=[
            pl.BlockSpec((1, te), lambda e, n: (0, e)),
            pl.BlockSpec((1, te), lambda e, n: (0, e)),
            pl.BlockSpec((tn, 1), lambda e, n: (n, 0)),
            pl.BlockSpec((tn, 1), lambda e, n: (n, 0)),
            pl.BlockSpec(memory_space=pltpu.MemorySpace.SMEM),
        ],
        out_specs=pl.BlockSpec((1, te), lambda e, n: (0, e)),
        scratch_shapes=[pltpu.VMEM((1, te), f32)],
        compiler_params=pltpu.CompilerParams(
            dimension_semantics=("parallel", "arbitrary")),
    )(src_ids, dst_ids, ps, pd, b_e)

    return scores[0, :E]


# ----------------------------------------------------------------------------
# Pure-JAX reference (for correctness check)
# ----------------------------------------------------------------------------
def diffgcn_reference(x_t, edge_index, params):
    (w_enc, b_enc, w_gcn, b_gcn, w_edge, b_edge) = params
    N = x_t.shape[0]

    x = jnp.maximum(x_t @ w_enc + b_enc, 0.0)

    loops = jnp.arange(N, dtype=edge_index.dtype)
    ei = jnp.concatenate([edge_index, jnp.stack([loops, loops], 0)], axis=1)
    row, col = ei[0], ei[1]
    deg = jnp.zeros((N,), f32).at[col].add(1.0)
    dinv = jnp.where(deg > 0, 1.0 / jnp.sqrt(deg), 0.0)
    norm = dinv[row] * dinv[col]

    xw = x @ w_gcn
    msgs = norm[:, None] * xw[row]
    agg = jnp.zeros_like(xw).at[col].add(msgs) + b_gcn
    x = jnp.maximum(agg, 0.0)

    src, dst = edge_index[0], edge_index[1]
    edge_repr = jnp.concatenate([x[src], x[dst]], axis=-1)
    logits = edge_repr @ w_edge + b_edge
    return jax.nn.sigmoid(logits).reshape(-1)


# ----------------------------------------------------------------------------
if __name__ == "__main__":
    key = jax.random.PRNGKey(0)

    # Small shapes consistent with DiffGCN(in_feats=7, hidden_dim=32)
    N, E, F, H = 16, 24, 7, 32

    keys = jax.random.split(key, 10)
    x_t = jax.random.normal(keys[0], (N, F), dtype=jnp.float32)
    x_t_dt = jax.random.normal(keys[1], (N, F), dtype=jnp.float32)  # unused in fwd
    src = jax.random.randint(keys[2], (E,), 0, N, dtype=jnp.int32)
    dst = jax.random.randint(keys[3], (E,), 0, N, dtype=jnp.int32)
    edge_index = jnp.stack([src, dst], axis=0)

    # Deterministic parameter init (shapes per module __init__)
    w_enc = 0.1 * jax.random.normal(keys[4], (F, H), dtype=jnp.float32)
    b_enc = 0.01 * jnp.arange(H, dtype=jnp.float32)
    w_gcn = 0.1 * jax.random.normal(keys[5], (H, H), dtype=jnp.float32)
    b_gcn = 0.01 * jnp.ones((H,), dtype=jnp.float32)
    w_edge = 0.1 * jax.random.normal(keys[6], (2 * H,), dtype=jnp.float32)
    b_edge = jnp.array(0.05, dtype=jnp.float32)
    params = (w_enc, b_enc, w_gcn, b_gcn, w_edge, b_edge)

    # Graph preprocessing can be cached across timesteps; pass it explicitly here.
    graph = precompute_graph(edge_index, N)

    scores = diffgcn_forward(x_t, x_t_dt, edge_index, params, graph=graph)
    scores = jax.block_until_ready(scores)

    ref = diffgcn_reference(x_t, edge_index, params)
    assert scores.shape == (E,)
    assert jnp.allclose(scores, ref, atol=1e-5, rtol=1e-5), (scores, ref)

    print("KERNEL_OK")
</pallas_src>

<mosaic_0001>
module attributes {stable_mosaic.version = 11 : i64} {
  func.func @_node_proj_kernel(%arg0: i32, %arg1: memref<128x7xf32, #tpu.memory_space<vmem>>, %arg2: memref<7x32xf32, #tpu.memory_space<vmem>>, %arg3: memref<1x32xf32, #tpu.memory_space<vmem>>, %arg4: memref<32x32xf32, #tpu.memory_space<vmem>>, %arg5: memref<128x32xf32, #tpu.memory_space<vmem>>) attributes {dimension_semantics = [#tpu.dimension_semantics<parallel>], iteration_bounds = array<i64: 1>, scalar_prefetch = 0 : i64, scratch_operands = 0 : i64, tpu.core_type = #tpu.core_type<tc>, window_params = [{transform_indices = @transform_0, window_bounds = array<i64: 128, 7>}, {pipeline_mode = #tpu.pipeline_mode<synchronous>, transform_indices = @transform_1, window_bounds = array<i64: 7, 32>}, {pipeline_mode = #tpu.pipeline_mode<synchronous>, transform_indices = @transform_2, window_bounds = array<i64: 1, 32>}, {pipeline_mode = #tpu.pipeline_mode<synchronous>, transform_indices = @transform_3, window_bounds = array<i64: 32, 32>}, {transform_indices = @transform_4, window_bounds = array<i64: 128, 32>}]} {
    %c0 = arith.constant 0 : index
    %c0_0 = arith.constant 0 : index
    %0 = vector.load %arg1[%c0, %c0_0] : memref<128x7xf32, #tpu.memory_space<vmem>>, vector<128x7xf32>
    %c0_1 = arith.constant 0 : index
    %c0_2 = arith.constant 0 : index
    %1 = vector.load %arg2[%c0_1, %c0_2] : memref<7x32xf32, #tpu.memory_space<vmem>>, vector<7x32xf32>
    %cst = arith.constant dense<0.000000e+00> : vector<128x32xf32>
    %2 = tpu.matmul %0, %1, %cst {dimension_numbers = #tpu.dot_dimension_numbers<[1], [0], [0], [1], [0, 0, 1, 1], [], []>} : vector<128x7xf32>, vector<7x32xf32>, vector<128x32xf32> -> vector<128x32xf32>
    %c0_3 = arith.constant 0 : index
    %c0_4 = arith.constant 0 : index
    %3 = vector.load %arg3[%c0_3, %c0_4] : memref<1x32xf32, #tpu.memory_space<vmem>>, vector<1x32xf32>
    %4 = vector.broadcast %3 : vector<1x32xf32> to vector<128x32xf32>
    %5 = arith.addf %2, %4 : vector<128x32xf32>
    %cst_5 = arith.constant 0.000000e+00 : f32
    %6 = vector.broadcast %cst_5 : f32 to vector<128x32xf32>
    %7 = arith.maximumf %5, %6 : vector<128x32xf32>
    %c0_6 = arith.constant 0 : index
    %c0_7 = arith.constant 0 : index
    %8 = vector.load %arg4[%c0_6, %c0_7] : memref<32x32xf32, #tpu.memory_space<vmem>>, vector<32x32xf32>
    %cst_8 = arith.constant dense<0.000000e+00> : vector<128x32xf32>
    %9 = tpu.matmul %7, %8, %cst_8 {dimension_numbers = #tpu.dot_dimension_numbers<[1], [0], [0], [1], [0, 0, 1, 1], [], []>} : vector<128x32xf32>, vector<32x32xf32>, vector<128x32xf32> -> vector<128x32xf32>
    %c0_9 = arith.constant 0 : index
    %c0_10 = arith.constant 0 : index
    %10 = vector.load %arg5[%c0_9, %c0_10] : memref<128x32xf32, #tpu.memory_space<vmem>>, vector<128x32xf32>
    tpu.vector_store %arg5[%c0_9, %c0_10], %9 {strides = array<i32>} : memref<128x32xf32, #tpu.memory_space<vmem>>, vector<128x32xf32>,
    return
  }
  func.func @transform_0(%arg0: i32) -> (i32, i32) {
    %c0_i32 = arith.constant 0 : i32
    %c0_i32_0 = arith.constant 0 : i32
    return %arg0, %c0_i32 : i32, i32
  }
  func.func @transform_1(%arg0: i32) -> (i32, i32) {
    %c0_i32 = arith.constant 0 : i32
    %c0_i32_0 = arith.constant 0 : i32
    %c0_i32_1 = arith.constant 0 : i32
    return %c0_i32, %c0_i32_0 : i32, i32
  }
  func.func @transform_2(%arg0: i32) -> (i32, i32) {
    %c0_i32 = arith.constant 0 : i32
    %c0_i32_0 = arith.constant 0 : i32
    %c0_i32_1 = arith.constant 0 : i32
    return %c0_i32, %c0_i32_0 : i32, i32
  }
  func.func @transform_3(%arg0: i32) -> (i32, i32) {
    %c0_i32 = arith.constant 0 : i32
    %c0_i32_0 = arith.constant 0 : i32
    %c0_i32_1 = arith.constant 0 : i32
    return %c0_i32, %c0_i32_0 : i32, i32
  }
  func.func @transform_4(%arg0: i32) -> (i32, i32) {
    %c0_i32 = arith.constant 0 : i32
    %c0_i32_0 = arith.constant 0 : i32
    return %arg0, %c0_i32 : i32, i32
  }
}

</mosaic_0001>

<llo_original>
// kernel: tpu_custom_call.1
$region0: #{tpu_custom_call.1}
  #allocation0 [shape = 'u32[]', space=smem, size = 0x4, offset = 0x4, fixed_abs, tag = 'smem constant byte address 0x4 - core index']
  #allocation1 [shape = 'u32[72,128]{1,0:T(1,128)}', space=vmem, size = 0x9000, scoped, tag = 'internal scratch']
  %s0 = inlined_call_operand.vmem [shape: f32[128,7], index: 0, kind: input, shape index: {}]
  %s1 = inlined_call_operand.vmem [shape: f32[7,32], index: 1, kind: input, shape index: {}]
  %s2 = inlined_call_operand.vmem [shape: f32[1,32], index: 2, kind: input, shape index: {}]
  %s3 = inlined_call_operand.vmem [shape: f32[32,32], index: 3, kind: input, shape index: {}]
  %s4 = inlined_call_operand.vmem [shape: f32[128,32], index: 4, kind: output, shape index: {}]
  %s5 = sld [smem:[#allocation0]]
  $region26: #{tpu_custom_call.1} parent=0
    _
  %s7 = ssub.s32 1, %s5
  %s8 = scalar_select 0, %s7, %s5
  // Predicated region
  $region2: #{tpu_custom_call.1} parent=0 // pred_check
    _
  $region3: #{tpu_custom_call.1} parent=0 // pred_check_branch
    %10 = sbr.rel (0) target = $region5
  $region4: #{tpu_custom_call.1} parent=0 // pred_region
    _
  $region5: #{tpu_custom_call.1} parent=0 // pred_fallthru
    _
  // Predicated region
  $region6: #{tpu_custom_call.1} parent=0 // pred_check
    _
  $region7: #{tpu_custom_call.1} parent=0 // pred_check_branch
    %12 = sbr.rel (0) target = $region9
  $region8: #{tpu_custom_call.1} parent=0 // pred_region
    _
  $region9: #{tpu_custom_call.1} parent=0 // pred_fallthru
    _
  // Predicated region
  $region10: #{tpu_custom_call.1} parent=0 // pred_check
    _
  $region11: #{tpu_custom_call.1} parent=0 // pred_check_branch
    %14 = sbr.rel (0) target = $region13
  $region12: #{tpu_custom_call.1} parent=0 // pred_region
    _
  $region13: #{tpu_custom_call.1} parent=0 // pred_fallthru
    _
  // Predicated region
  $region14: #{tpu_custom_call.1} parent=0 // pred_check
    _
  $region15: #{tpu_custom_call.1} parent=0 // pred_check_branch
    %16 = sbr.rel (0) target = $region17
  $region16: #{tpu_custom_call.1} parent=0 // pred_region
    _
  $region17: #{tpu_custom_call.1} parent=0 // pred_fallthru
    _
  %v17 = vld [vmem:[%s0] sm:$0xff]
  %v18 = vld [vmem:[%s0 + $0x8] sm:$0xff]
  %v19 = vld [vmem:[%s0 + $0x10] sm:$0xff]
  %v20 = vld [vmem:[%s0 + $0x18] sm:$0xff]
  %v21 = vld [vmem:[%s0 + $0x20] sm:$0xff]
  %v22 = vld [vmem:[%s0 + $0x28] sm:$0xff]
  %v23 = vld [vmem:[%s0 + $0x30] sm:$0xff]
  %v24 = vld [vmem:[%s0 + $0x38] sm:$0xff]
  %v25 = vld [vmem:[%s0 + $0x40] sm:$0xff]
  %v26 = vld [vmem:[%s0 + $0x48] sm:$0xff]
  %v27 = vld [vmem:[%s0 + $0x50] sm:$0xff]
  %v28 = vld [vmem:[%s0 + $0x58] sm:$0xff]
  %v29 = vld [vmem:[%s0 + $0x60] sm:$0xff]
  %v30 = vld [vmem:[%s0 + $0x68] sm:$0xff]
  %v31 = vld [vmem:[%s0 + $0x70] sm:$0xff]
  %v32 = vld [vmem:[%s0 + $0x78] sm:$0xff]
  %v33 = vld [vmem:[%s1] sm:$0x7f]
  %v34 = vld [vmem:[%s2] sm:$0x1]
  %v36 = vperm.slane %v34, 0
  %vm38 = vcmask 56320
  %v40 = vsel %vm38, %v17, 0
  %v43 = vsel %vm38, %v18, 0
  %v46 = vsel %vm38, %v19, 0
  %v49 = vsel %vm38, %v20, 0
  %v52 = vsel %vm38, %v21, 0
  %v55 = vsel %vm38, %v22, 0
  %v58 = vsel %vm38, %v23, 0
  %v61 = vsel %vm38, %v24, 0
  %v64 = vsel %vm38, %v25, 0
  %v67 = vsel %vm38, %v26, 0
  %v70 = vsel %vm38, %v27, 0
  %v73 = vsel %vm38, %v28, 0
  %v76 = vsel %vm38, %v29, 0
  %v79 = vsel %vm38, %v30, 0
  %v82 = vsel %vm38, %v31, 0
  %v85 = vsel %vm38, %v32, 0
  %vm87 = vcmask 1046528
  %v89 = vsel %vm87, %v33, 0
  %91 = vmatpush.msra.mxu0 0.0
  %92 = vmatpush.msra.mxu0 0.0
  %93 = vmatpush.msra.mxu0 0.0
  %94 = vmatpush.msra.mxu0 0.0
  %95 = vmatpush.msra.mxu0 0.0
  %96 = vmatpush.msra.mxu0 0.0
  %97 = vmatpush.msra.mxu0 0.0
  %98 = vmatpush.msra.mxu0 0.0
  %99 = vmatpush.msra.mxu0 0.0
  %100 = vmatpush.msra.mxu0 0.0
  %101 = vmatpush.msra.mxu0 0.0
  %102 = vmatpush.msra.mxu0 0.0
  %103 = vmatpush.msra.mxu0 0.0
  %104 = vmatpush.msra.mxu0 0.0
  %105 = vmatpush.msra.mxu0 0.0
  %106 = vmatpush.msra.mxu0 %v89
  %107 = vmatmul.f32.gmra.mxu0 %v40
  %v108 = vpop.f32.mrf.mxu0
  %v109 = vadd.f32 %v36, %v108
  %110 = vmatmul.f32.gmra.mxu0 %v43
  %v111 = vpop.f32.mrf.mxu0
  %v112 = vadd.f32 %v36, %v111
  %113 = vmatmul.f32.gmra.mxu0 %v46
  %v114 = vpop.f32.mrf.mxu0
  %v115 = vadd.f32 %v36, %v114
  %116 = vmatmul.f32.gmra.mxu0 %v49
  %v117 = vpop.f32.mrf.mxu0
  %v118 = vadd.f32 %v36, %v117
  %119 = vmatmul.f32.gmra.mxu0 %v52
  %v120 = vpop.f32.mrf.mxu0
  %v121 = vadd.f32 %v36, %v120
  %122 = vmatmul.f32.gmra.mxu0 %v55
  %v123 = vpop.f32.mrf.mxu0
  %v124 = vadd.f32 %v36, %v123
  %125 = vmatmul.f32.gmra.mxu0 %v58
  %v126 = vpop.f32.mrf.mxu0
  %v127 = vadd.f32 %v36, %v126
  %128 = vmatmul.f32.gmra.mxu0 %v61
  %v129 = vpop.f32.mrf.mxu0
  %v130 = vadd.f32 %v36, %v129
  %131 = vmatmul.f32.gmra.mxu0 %v64
  %v132 = vpop.f32.mrf.mxu0
  %v133 = vadd.f32 %v36, %v132
  %134 = vmatmul.f32.gmra.mxu0 %v67
  %v135 = vpop.f32.mrf.mxu0
  %v136 = vadd.f32 %v36, %v135
  %137 = vmatmul.f32.gmra.mxu0 %v70
  %v138 = vpop.f32.mrf.mxu0
  %v139 = vadd.f32 %v36, %v138
  %140 = vmatmul.f32.gmra.mxu0 %v73
  %v141 = vpop.f32.mrf.mxu0
  %v142 = vadd.f32 %v36, %v141
  %143 = vmatmul.f32.gmra.mxu0 %v76
  %v144 = vpop.f32.mrf.mxu0
  %v145 = vadd.f32 %v36, %v144
  %146 = vmatmul.f32.gmra.mxu0 %v79
  %v147 = vpop.f32.mrf.mxu0
  %v148 = vadd.f32 %v36, %v147
  %149 = vmatmul.f32.gmra.mxu0 %v82
  %v150 = vpop.f32.mrf.mxu0
  %v151 = vadd.f32 %v36, %v150
  %152 = vmatmul.f32.gmra.mxu0 %v85
  %v153 = vpop.f32.mrf.mxu0
  %v154 = vadd.f32 %v36, %v153
  %155 = vdwg.mxu0
  %v156 = vmax.f32 %v109, 0.0
  %v157 = vmax.f32 %v112, 0.0
  %v158 = vmax.f32 %v115, 0.0
  %v159 = vmax.f32 %v118, 0.0
  %v160 = vmax.f32 %v121, 0.0
  %v161 = vmax.f32 %v124, 0.0
  %v162 = vmax.f32 %v127, 0.0
  %v163 = vmax.f32 %v130, 0.0
  %v164 = vmax.f32 %v133, 0.0
  %v165 = vmax.f32 %v136, 0.0
  %v166 = vmax.f32 %v139, 0.0
  %v167 = vmax.f32 %v142, 0.0
  %v168 = vmax.f32 %v145, 0.0
  %v169 = vmax.f32 %v148, 0.0
  %v170 = vmax.f32 %v151, 0.0
  %v171 = vmax.f32 %v154, 0.0
  %v172 = vld [vmem:[%s3] sm:$0xff]
  %v173 = vld [vmem:[%s3 + $0x8] sm:$0xff]
  %v174 = vld [vmem:[%s3 + $0x10] sm:$0xff]
  %v175 = vld [vmem:[%s3 + $0x18] sm:$0xff]
  %vm176 = vcmask 261120
  %v178 = vsel %vm176, %v156, 0
  %v181 = vsel %vm176, %v157, 0
  %v184 = vsel %vm176, %v158, 0
  %v187 = vsel %vm176, %v159, 0
  %v190 = vsel %vm176, %v160, 0
  %v193 = vsel %vm176, %v161, 0
  %v196 = vsel %vm176, %v162, 0
  %v199 = vsel %vm176, %v163, 0
  %v202 = vsel %vm176, %v164, 0
  %v205 = vsel %vm176, %v165, 0
  %v208 = vsel %vm176, %v166, 0
  %v211 = vsel %vm176, %v167, 0
  %v214 = vsel %vm176, %v168, 0
  %v217 = vsel %vm176, %v169, 0
  %v220 = vsel %vm176, %v170, 0
  %v223 = vsel %vm176, %v171, 0
  %225 = vmatpush.msra.mxu0 0.0
  %226 = vmatpush.msra.mxu0 0.0
  %227 = vmatpush.msra.mxu0 0.0
  %228 = vmatpush.msra.mxu0 0.0
  %229 = vmatpush.msra.mxu0 0.0
  %230 = vmatpush.msra.mxu0 0.0
  %231 = vmatpush.msra.mxu0 0.0
  %232 = vmatpush.msra.mxu0 0.0
  %233 = vmatpush.msra.mxu0 0.0
  %234 = vmatpush.msra.mxu0 0.0
  %235 = vmatpush.msra.mxu0 0.0
  %236 = vmatpush.msra.mxu0 0.0
  %237 = vmatpush.msra.mxu0 %v175
  %238 = vmatpush.msra.mxu0 %v174
  %239 = vmatpush.msra.mxu0 %v173
  %240 = vmatpush.msra.mxu0 %v172
  %241 = vmatmul.f32.gmra.mxu0 %v178
  %v242 = vpop.f32.mrf.mxu0
  %v243 = vadd.f32 0.0, %v242
  %244 = vmatmul.f32.gmra.mxu0 %v181
  %v245 = vpop.f32.mrf.mxu0
  %v246 = vadd.f32 0.0, %v245
  %247 = vmatmul.f32.gmra.mxu0 %v184
  %v248 = vpop.f32.mrf.mxu0
  %v249 = vadd.f32 0.0, %v248
  %250 = vmatmul.f32.gmra.mxu0 %v187
  %v251 = vpop.f32.mrf.mxu0
  %v252 = vadd.f32 0.0, %v251
  %253 = vmatmul.f32.gmra.mxu0 %v190
  %v254 = vpop.f32.mrf.mxu0
  %v255 = vadd.f32 0.0, %v254
  %256 = vmatmul.f32.gmra.mxu0 %v193
  %v257 = vpop.f32.mrf.mxu0
  %v258 = vadd.f32 0.0, %v257
  %259 = vmatmul.f32.gmra.mxu0 %v196
  %v260 = vpop.f32.mrf.mxu0
  %v261 = vadd.f32 0.0, %v260
  %262 = vmatmul.f32.gmra.mxu0 %v199
  %v263 = vpop.f32.mrf.mxu0
  %v264 = vadd.f32 0.0, %v263
  %265 = vmatmul.f32.gmra.mxu0 %v202
  %v266 = vpop.f32.mrf.mxu0
  %v267 = vadd.f32 0.0, %v266
  %268 = vmatmul.f32.gmra.mxu0 %v205
  %v269 = vpop.f32.mrf.mxu0
  %v270 = vadd.f32 0.0, %v269
  %271 = vmatmul.f32.gmra.mxu0 %v208
  %v272 = vpop.f32.mrf.mxu0
  %v273 = vadd.f32 0.0, %v272
  %274 = vmatmul.f32.gmra.mxu0 %v211
  %v275 = vpop.f32.mrf.mxu0
  %v276 = vadd.f32 0.0, %v275
  %277 = vmatmul.f32.gmra.mxu0 %v214
  %v278 = vpop.f32.mrf.mxu0
  %v279 = vadd.f32 0.0, %v278
  %280 = vmatmul.f32.gmra.mxu0 %v217
  %v281 = vpop.f32.mrf.mxu0
  %v282 = vadd.f32 0.0, %v281
  %283 = vmatmul.f32.gmra.mxu0 %v220
  %v284 = vpop.f32.mrf.mxu0
  %v285 = vadd.f32 0.0, %v284
  %286 = vmatmul.f32.gmra.mxu0 %v223
  %v287 = vpop.f32.mrf.mxu0
  %v288 = vadd.f32 0.0, %v287
  %289 = vdwg.mxu0
  %290 = vst.msk [vmem:[%s4] sm:$0xff] %vm176, %v243
  %291 = vst.msk [vmem:[%s4 + $0x8] sm:$0xff] %vm176, %v246
  %292 = vst.msk [vmem:[%s4 + $0x10] sm:$0xff] %vm176, %v249
  %293 = vst.msk [vmem:[%s4 + $0x18] sm:$0xff] %vm176, %v252
  %294 = vst.msk [vmem:[%s4 + $0x20] sm:$0xff] %vm176, %v255
  %295 = vst.msk [vmem:[%s4 + $0x28] sm:$0xff] %vm176, %v258
  %296 = vst.msk [vmem:[%s4 + $0x30] sm:$0xff] %vm176, %v261
  %297 = vst.msk [vmem:[%s4 + $0x38] sm:$0xff] %vm176, %v264
  %298 = vst.msk [vmem:[%s4 + $0x40] sm:$0xff] %vm176, %v267
  %299 = vst.msk [vmem:[%s4 + $0x48] sm:$0xff] %vm176, %v270
  %300 = vst.msk [vmem:[%s4 + $0x50] sm:$0xff] %vm176, %v273
  %301 = vst.msk [vmem:[%s4 + $0x58] sm:$0xff] %vm176, %v276
  %302 = vst.msk [vmem:[%s4 + $0x60] sm:$0xff] %vm176, %v279
  %303 = vst.msk [vmem:[%s4 + $0x68] sm:$0xff] %vm176, %v282
  %304 = vst.msk [vmem:[%s4 + $0x70] sm:$0xff] %vm176, %v285
  %305 = vst.msk [vmem:[%s4 + $0x78] sm:$0xff] %vm176, %v288
  // Predicated region
  $region18: #{tpu_custom_call.1} parent=0 // pred_check
    _
  $region19: #{tpu_custom_call.1} parent=0 // pred_check_branch
    %307 = sbr.rel (0) target = $region21
  $region20: #{tpu_custom_call.1} parent=0 // pred_region
    _
  $region21: #{tpu_custom_call.1} parent=0 // pred_fallthru
    _
  // Predicated region
  $region22: #{tpu_custom_call.1} parent=0 // pred_check
    _
  $region23: #{tpu_custom_call.1} parent=0 // pred_check_branch
    %309 = sbr.rel (0) target = $region25
  $region24: #{tpu_custom_call.1} parent=0 // pred_region
    _
  $region25: #{tpu_custom_call.1} parent=0 // pred_fallthru
    _

</llo_original>
